<compile_context>
chip_gen: v6e
topology: v6e:2x2x1
jax: 0.10.0
libtpu: 0.0.40
codegen_flags: <defaults>
</compile_context>

<pallas_src>
import functools

import jax
import jax.numpy as jnp
from jax.experimental import pallas as pl
from jax.experimental.pallas import tpu as pltpu


def _recurrent_cycle_kernel(idx_ref, data_ref, out_ref, *, cycle_len):
    # idx_ref : SMEM int32 (B,)
    # data_ref: VMEM (n_tiles*cycle_len, channel)   pre-tiled cycle table
    # out_ref : VMEM (B, length, channel)
    B, length, _ = out_ref.shape
    rows = []
    for b in range(B):                       # B is static -> fully unrolled
        start = idx_ref[b] % cycle_len       # scalar floor-mod on the scalar unit
        rows.append(data_ref[pl.ds(start, length), :])   # cyclic window == slice
    # Single full-slab store instead of B small masked writes.
    out_ref[...] = jnp.stack(rows, axis=0).astype(out_ref.dtype)


def recurrent_cycle(index, data, length):
    """index: int (B,), data: (cycle_len, channel) -> (B, length, channel)."""
    index = index.reshape(-1).astype(jnp.int32)          # matches index.view(-1, 1)
    B = index.shape[0]
    cycle_len, channel_size = data.shape

    # Pre-tile so any window [start, start+length) with 0 <= start < cycle_len is a
    # contiguous slice (a one-time concatenate outside the kernel).
    n_tiles = pl.cdiv(length, cycle_len) + 1
    data_tiled = jnp.concatenate([data] * n_tiles, axis=0)

    kernel = functools.partial(_recurrent_cycle_kernel, cycle_len=cycle_len)
    return pl.pallas_call(
        kernel,
        out_shape=jax.ShapeDtypeStruct((B, length, channel_size), data.dtype),
        in_specs=[
            pl.BlockSpec(memory_space=pltpu.MemorySpace.SMEM),   # index (scalars)
            pl.BlockSpec(memory_space=pltpu.MemorySpace.VMEM),   # tiled cycle table
        ],
        out_specs=pl.BlockSpec(memory_space=pltpu.MemorySpace.VMEM),
    )(index, data_tiled)


def recurrent_cycle_reference(index, data, length):
    """Pure-JAX reference mirroring the PyTorch forward."""
    cycle_len = data.shape[0]
    gather_index = (index.reshape(-1, 1) + jnp.arange(length).reshape(1, -1)) % cycle_len
    return data[gather_index]


if __name__ == "__main__":
    # Module hyperparameters (deterministic synthetic init).
    cycle_len = 24
    channel_size = 16
    length = 12
    batch = 4

    key = jax.random.PRNGKey(0)
    data = jax.random.normal(key, (cycle_len, channel_size), dtype=jnp.float32)
    # Include an index >= cycle_len to exercise the in-kernel modulo.
    index = jnp.array([0, 5, 30, 23], dtype=jnp.int32)

    out = jax.block_until_ready(recurrent_cycle(index, data, length))
    ref = recurrent_cycle_reference(index, data, length)

    assert out.shape == (batch, length, channel_size), out.shape
    assert jnp.allclose(out, ref, atol=1e-6), "mismatch vs reference"

    print("KERNEL_OK")
</pallas_src>

<mosaic_0001>
module attributes {stable_mosaic.version = 11 : i64} {
  func.func @_recurrent_cycle_kernel(%arg0: memref<4xi32, #tpu.memory_space<smem>>, %arg1: memref<48x16xf32, #tpu.memory_space<vmem>>, %arg2: memref<4x12x16xf32, #tpu.memory_space<vmem>>) attributes {dimension_semantics = [], scalar_prefetch = 0 : i64, scratch_operands = 0 : i64, tpu.core_type = #tpu.core_type<tc>} {
    %c0 = arith.constant 0 : index
    %0 = memref.load %arg0[%c0] : memref<4xi32, #tpu.memory_space<smem>>
    %c24_i32 = arith.constant 24 : i32
    %c0_i32 = arith.constant 0 : i32
    %1 = arith.cmpi eq, %c24_i32, %c0_i32 : i32
    %c1_i32 = arith.constant 1 : i32
    %2 = arith.select %1, %c1_i32, %c24_i32 : i32
    %3 = arith.remsi %0, %2 : i32
    %c0_i32_0 = arith.constant 0 : i32
    %4 = arith.cmpi ne, %3, %c0_i32_0 : i32
    %c0_i32_1 = arith.constant 0 : i32
    %5 = arith.cmpi slt, %3, %c0_i32_1 : i32
    %c0_i32_2 = arith.constant 0 : i32
    %6 = arith.cmpi slt, %2, %c0_i32_2 : i32
    %7 = arith.xori %5, %6 : i1
    %8 = arith.andi %7, %4 : i1
    %9 = arith.addi %3, %2 : i32
    %10 = arith.select %8, %9, %3 : i32
    %11 = arith.index_cast %10 : i32 to index
    %c0_3 = arith.constant 0 : index
    %12 = vector.load %arg1[%11, %c0_3] : memref<48x16xf32, #tpu.memory_space<vmem>>, vector<12x16xf32>
    %c1 = arith.constant 1 : index
    %13 = memref.load %arg0[%c1] : memref<4xi32, #tpu.memory_space<smem>>
    %c24_i32_4 = arith.constant 24 : i32
    %c0_i32_5 = arith.constant 0 : i32
    %14 = arith.cmpi eq, %c24_i32_4, %c0_i32_5 : i32
    %c1_i32_6 = arith.constant 1 : i32
    %15 = arith.select %14, %c1_i32_6, %c24_i32_4 : i32
    %16 = arith.remsi %13, %15 : i32
    %c0_i32_7 = arith.constant 0 : i32
    %17 = arith.cmpi ne, %16, %c0_i32_7 : i32
    %c0_i32_8 = arith.constant 0 : i32
    %18 = arith.cmpi slt, %16, %c0_i32_8 : i32
    %c0_i32_9 = arith.constant 0 : i32
    %19 = arith.cmpi slt, %15, %c0_i32_9 : i32
    %20 = arith.xori %18, %19 : i1
    %21 = arith.andi %20, %17 : i1
    %22 = arith.addi %16, %15 : i32
    %23 = arith.select %21, %22, %16 : i32
    %24 = arith.index_cast %23 : i32 to index
    %c0_10 = arith.constant 0 : index
    %25 = vector.load %arg1[%24, %c0_10] : memref<48x16xf32, #tpu.memory_space<vmem>>, vector<12x16xf32>
    %c2 = arith.constant 2 : index
    %26 = memref.load %arg0[%c2] : memref<4xi32, #tpu.memory_space<smem>>
    %c24_i32_11 = arith.constant 24 : i32
    %c0_i32_12 = arith.constant 0 : i32
    %27 = arith.cmpi eq, %c24_i32_11, %c0_i32_12 : i32
    %c1_i32_13 = arith.constant 1 : i32
    %28 = arith.select %27, %c1_i32_13, %c24_i32_11 : i32
    %29 = arith.remsi %26, %28 : i32
    %c0_i32_14 = arith.constant 0 : i32
    %30 = arith.cmpi ne, %29, %c0_i32_14 : i32
    %c0_i32_15 = arith.constant 0 : i32
    %31 = arith.cmpi slt, %29, %c0_i32_15 : i32
    %c0_i32_16 = arith.constant 0 : i32
    %32 = arith.cmpi slt, %28, %c0_i32_16 : i32
    %33 = arith.xori %31, %32 : i1
    %34 = arith.andi %33, %30 : i1
    %35 = arith.addi %29, %28 : i32
    %36 = arith.select %34, %35, %29 : i32
    %37 = arith.index_cast %36 : i32 to index
    %c0_17 = arith.constant 0 : index
    %38 = vector.load %arg1[%37, %c0_17] : memref<48x16xf32, #tpu.memory_space<vmem>>, vector<12x16xf32>
    %c3 = arith.constant 3 : index
    %39 = memref.load %arg0[%c3] : memref<4xi32, #tpu.memory_space<smem>>
    %c24_i32_18 = arith.constant 24 : i32
    %c0_i32_19 = arith.constant 0 : i32
    %40 = arith.cmpi eq, %c24_i32_18, %c0_i32_19 : i32
    %c1_i32_20 = arith.constant 1 : i32
    %41 = arith.select %40, %c1_i32_20, %c24_i32_18 : i32
    %42 = arith.remsi %39, %41 : i32
    %c0_i32_21 = arith.constant 0 : i32
    %43 = arith.cmpi ne, %42, %c0_i32_21 : i32
    %c0_i32_22 = arith.constant 0 : i32
    %44 = arith.cmpi slt, %42, %c0_i32_22 : i32
    %c0_i32_23 = arith.constant 0 : i32
    %45 = arith.cmpi slt, %41, %c0_i32_23 : i32
    %46 = arith.xori %44, %45 : i1
    %47 = arith.andi %46, %43 : i1
    %48 = arith.addi %42, %41 : i32
    %49 = arith.select %47, %48, %42 : i32
    %50 = arith.index_cast %49 : i32 to index
    %c0_24 = arith.constant 0 : index
    %51 = vector.load %arg1[%50, %c0_24] : memref<48x16xf32, #tpu.memory_space<vmem>>, vector<12x16xf32>
    %52 = vector.shape_cast %12 : vector<12x16xf32> to vector<1x12x16xf32>
    %53 = vector.shape_cast %25 : vector<12x16xf32> to vector<1x12x16xf32>
    %54 = vector.shape_cast %38 : vector<12x16xf32> to vector<1x12x16xf32>
    %55 = vector.shape_cast %51 : vector<12x16xf32> to vector<1x12x16xf32>
    %56 = tpu.concatenate %52, %53, %54, %55 in 0 : vector<1x12x16xf32>, vector<1x12x16xf32>, vector<1x12x16xf32>, vector<1x12x16xf32> -> vector<4x12x16xf32>
    %c0_25 = arith.constant 0 : index
    %c0_26 = arith.constant 0 : index
    %c0_27 = arith.constant 0 : index
    %57 = vector.load %arg2[%c0_25, %c0_26, %c0_27] : memref<4x12x16xf32, #tpu.memory_space<vmem>>, vector<4x12x16xf32>
    tpu.vector_store %arg2[%c0_25, %c0_26, %c0_27], %56 {strides = array<i32>} : memref<4x12x16xf32, #tpu.memory_space<vmem>>, vector<4x12x16xf32>,
    return
  }
}

</mosaic_0001>

<llo_original>
// kernel: tpu_custom_call.1
$region0: #{tpu_custom_call.1}
  #allocation0 [shape = 'u32[]', space=smem, size = 0x4, offset = 0x4, fixed_abs, tag = 'smem constant byte address 0x4 - core index']
  #allocation1 [shape = 'u32[144,128]{1,0:T(1,128)}', space=vmem, size = 0x12000, scoped, tag = 'internal scratch']
  %s0 = inlined_call_operand.vmem [shape: s32[4], index: 0, kind: input, shape index: {}]
  %s1 = inlined_call_operand.vmem [shape: f32[48,16], index: 1, kind: input, shape index: {}]
  %s2 = inlined_call_operand.vmem [shape: f32[4,12,16], index: 2, kind: output, shape index: {}]
  %s3 = sld [smem:[#allocation0]]
  $region22: #{tpu_custom_call.1} parent=0
    _
  %s5 = ssub.s32 1, %s3
  %s6 = scalar_select 0, %s5, %s3
  $region1: #{tpu_custom_call.1} parent=0
    #allocation2 [shape = 'u8[512]{0}', space=smem, size = 0x200, scoped, tag = 'input window, operand 0, single buffered']
    #allocation3 [shape = 's32[1]{0}', space=sflag, size = 0x4, scoped, tag = 'scoped memory for tpu_custom_call.1']
    %7 = vsyncpa [#allocation3], 0
    // Predicated region
    $region2: #{tpu_custom_call.1} parent=1 // pred_check
      _
    $region3: #{tpu_custom_call.1} parent=1 // pred_check_branch
      %9 = sbr.rel (0) target = $region5
    $region4: #{tpu_custom_call.1} parent=1 // pred_region
      %s11 = ssub.s32 16, 16
      %12 = vsyncadd [#allocation3], %s11
      %s14 = sshll.u32 %s0, 4
      %s15 = int_to_ptr.vmem [resolvable:$true] %s14
      %17 = dma.vmem_to_smem %s15, 16, [#allocation2], [#allocation3]
    $region5: #{tpu_custom_call.1} parent=1 // pred_fallthru
      _
    // Predicated region
    $region6: #{tpu_custom_call.1} parent=1 // pred_check
      _
    $region7: #{tpu_custom_call.1} parent=1 // pred_check_branch
      %19 = sbr.rel (0) target = $region9
    $region8: #{tpu_custom_call.1} parent=1 // pred_region
      _
    $region9: #{tpu_custom_call.1} parent=1 // pred_fallthru
      _
    // Predicated region
    $region10: #{tpu_custom_call.1} parent=1 // pred_check
      _
    $region11: #{tpu_custom_call.1} parent=1 // pred_check_branch
      %21 = sbr.rel (0) target = $region13
    $region12: #{tpu_custom_call.1} parent=1 // pred_region
      %22 = dma.done [#allocation3], 16
    $region13: #{tpu_custom_call.1} parent=1 // pred_fallthru
      _
    %23 = sfence
    %s24 = sld [smem:[#allocation2]]
    %p25 = scmp.lt.s32.totalorder %s24, 0
    %s26 = ssub.s32 0, %s24
    %s27 = scalar_select %p25, %s26, %s24
    %s28 = sdiv.u32.pop %s27, 24
    %s29 = srem.u32.pop %s27, 24
    %s30 = ssub.s32 0, %s29
    %s31 = scalar_select %p25, %s30, %s29
    %p32 = scmp.ne.s32.totalorder %s31, 0
    %p33 = scmp.lt.s32.totalorder %s31, 0
    %p34 = pnand %p33, %p32
    %p35 = pneg %p34
    %s36 = sadd.s32 %s31, 24
    %s37 = scalar_select %p35, %s36, %s31
    %s38 = scalar_lea.vmem %s1, %s37
    %v39 = vld [vmem:[%s38] sm:$0xff]
    %v40 = vld [vmem:[%s38 + $0x8] sm:$0xf]
    %s41 = sld [smem:[#allocation2 + $0x1]]
    %p42 = scmp.lt.s32.totalorder %s41, 0
    %s43 = ssub.s32 0, %s41
    %s44 = scalar_select %p42, %s43, %s41
    %s45 = sdiv.u32.pop %s44, 24
    %s46 = srem.u32.pop %s44, 24
    %s47 = ssub.s32 0, %s46
    %s48 = scalar_select %p42, %s47, %s46
    %p49 = scmp.ne.s32.totalorder %s48, 0
    %p50 = scmp.lt.s32.totalorder %s48, 0
    %p51 = pnand %p50, %p49
    %p52 = pneg %p51
    %s53 = sadd.s32 %s48, 24
    %s54 = scalar_select %p52, %s53, %s48
    %s55 = scalar_lea.vmem %s1, %s54
    %v56 = vld [vmem:[%s55] sm:$0xff]
    %v57 = vld [vmem:[%s55 + $0x8] sm:$0xf]
    %s58 = sld [smem:[#allocation2 + $0x2]]
    %p59 = scmp.lt.s32.totalorder %s58, 0
    %s60 = ssub.s32 0, %s58
    %s61 = scalar_select %p59, %s60, %s58
    %s62 = sdiv.u32.pop %s61, 24
    %s63 = srem.u32.pop %s61, 24
    %s64 = ssub.s32 0, %s63
    %s65 = scalar_select %p59, %s64, %s63
    %p66 = scmp.ne.s32.totalorder %s65, 0
    %p67 = scmp.lt.s32.totalorder %s65, 0
    %p68 = pnand %p67, %p66
    %p69 = pneg %p68
    %s70 = sadd.s32 %s65, 24
    %s71 = scalar_select %p69, %s70, %s65
    %s72 = scalar_lea.vmem %s1, %s71
    %v73 = vld [vmem:[%s72] sm:$0xff]
    %v74 = vld [vmem:[%s72 + $0x8] sm:$0xf]
    %s75 = sld [smem:[#allocation2 + $0x3]]
    %p76 = scmp.lt.s32.totalorder %s75, 0
    %s77 = ssub.s32 0, %s75
    %s78 = scalar_select %p76, %s77, %s75
    %s79 = sdiv.u32.pop %s78, 24
    %s80 = srem.u32.pop %s78, 24
    %s81 = ssub.s32 0, %s80
    %s82 = scalar_select %p76, %s81, %s80
    %p83 = scmp.ne.s32.totalorder %s82, 0
    %p84 = scmp.lt.s32.totalorder %s82, 0
    %p85 = pnand %p84, %p83
    %p86 = pneg %p85
    %s87 = sadd.s32 %s82, 24
    %s88 = scalar_select %p86, %s87, %s82
    %s89 = scalar_lea.vmem %s1, %s88
    %v90 = vld [vmem:[%s89] sm:$0xff]
    %v91 = vld [vmem:[%s89 + $0x8] sm:$0xf]
    %vm92 = vcmask 130048
    %93 = vst.msk [vmem:[%s2] sm:$0xff] %vm92, %v39
    %vm94 = vcmask 125952
    %95 = vst.msk [vmem:[%s2 + $0x8] sm:$0xf] %vm94, %v40
    %96 = vst.msk [vmem:[%s2 + $0x10] sm:$0xff] %vm92, %v56
    %97 = vst.msk [vmem:[%s2 + $0x18] sm:$0xf] %vm94, %v57
    %98 = vst.msk [vmem:[%s2 + $0x20] sm:$0xff] %vm92, %v73
    %99 = vst.msk [vmem:[%s2 + $0x28] sm:$0xf] %vm94, %v74
    %100 = vst.msk [vmem:[%s2 + $0x30] sm:$0xff] %vm92, %v90
    %101 = vst.msk [vmem:[%s2 + $0x38] sm:$0xf] %vm94, %v91
    // Predicated region
    $region14: #{tpu_custom_call.1} parent=1 // pred_check
      _
    $region15: #{tpu_custom_call.1} parent=1 // pred_check_branch
      %103 = sbr.rel (0) target = $region17
    $region16: #{tpu_custom_call.1} parent=1 // pred_region
      _
    $region17: #{tpu_custom_call.1} parent=1 // pred_fallthru
      _
    // Predicated region
    $region18: #{tpu_custom_call.1} parent=1 // pred_check
      _
    $region19: #{tpu_custom_call.1} parent=1 // pred_check_branch
      %105 = sbr.rel (0) target = $region21
    $region20: #{tpu_custom_call.1} parent=1 // pred_region
      _
    $region21: #{tpu_custom_call.1} parent=1 // pred_fallthru
      _
    %106 = vsyncpa [#allocation3], 1

</llo_original>
